<compile_context>
chip_gen: v5e
topology: v5e:2x2
jax: 0.10.0
libtpu: 0.0.40
codegen_flags: <defaults>
</compile_context>

<pallas_src>
import jax
import jax.numpy as jnp
from jax import lax
from jax.experimental import pallas as pl
from jax.experimental.pallas import tpu as pltpu


def _gconv_rnn_kernel(at_ref, x_ref, o_ref):
    # at_ref: (B, W, V)  -- A pre-transposed; lhs contracts its last (lane) dim
    # x_ref : (B, V, C)  -- rhs contracts its second-to-last (sublane) dim
    # o_ref : (B, W, C)
    a_t = at_ref[...]
    x = x_ref[...]
    # out[b, w, c] = sum_v a_t[b, w, v] * x[b, v, c]   (batched A^T @ X)
    o_ref[...] = lax.dot_general(
        a_t, x,
        dimension_numbers=(((2,), (1,)), ((0,), (0,))),
        preferred_element_type=jnp.float32,
    ).astype(o_ref.dtype)


def gconv_rnn(x, A, *, batch_block=8):
    """x: (N, V, C), A: (N, V, W) -> (N, W, C) float32 (matches torch x.float())."""
    N, V, C = x.shape
    Na, Va, W = A.shape
    assert N == Na and V == Va, "x and A batch / node dims must match"

    # dtype policy: torch does x.float(); keep the bf16 MXU fast path when both
    # operands are already bf16 (f32 accumulate), otherwise promote to f32.
    if not (x.dtype == jnp.bfloat16 and A.dtype == jnp.bfloat16):
        x = x.astype(jnp.float32)
        A = A.astype(jnp.float32)

    # Pre-transpose A so the kernel lhs is (W, V) = (M, K); cheap XLA transpose,
    # usually fused upstream, removes a per-step XLU relayout inside the kernel.
    A_t = jnp.swapaxes(A, 1, 2)  # (N, W, V)

    # Largest batch block <= batch_block that divides N (every grid block full).
    B = max(1, min(batch_block, N))
    while N % B:
        B -= 1
    grid = (N // B,)

    itemsize = jnp.dtype(x.dtype).itemsize
    cost = pl.CostEstimate(
        flops=2 * N * V * W * C,
        transcendentals=0,
        bytes_accessed=N * (V * C + V * W) * itemsize + N * W * C * 4,
    )

    return pl.pallas_call(
        _gconv_rnn_kernel,
        out_shape=jax.ShapeDtypeStruct((N, W, C), jnp.float32),
        grid_spec=pltpu.PrefetchScalarGridSpec(
            num_scalar_prefetch=0,
            grid=grid,
            in_specs=[
                pl.BlockSpec((B, W, V), lambda i: (i, 0, 0)),   # A^T tile
                pl.BlockSpec((B, V, C), lambda i: (i, 0, 0)),   # x tile
            ],
            out_specs=pl.BlockSpec((B, W, C), lambda i: (i, 0, 0)),
        ),
        compiler_params=pltpu.CompilerParams(
            dimension_semantics=("parallel",),
        ),
        cost_estimate=cost,
    )(A_t, x)


if __name__ == "__main__":
    key = jax.random.PRNGKey(0)
    k1, k2 = jax.random.split(key)

    # Small shapes consistent with the forward: batch N=2, nodes V=W=16, channels C=32.
    N, V, W, C = 2, 16, 16, 32
    x = jax.random.normal(k1, (N, V, C), dtype=jnp.float32)
    A = jax.random.normal(k2, (N, V, W), dtype=jnp.float32)

    out = gconv_rnn(x, A)
    out = jax.block_until_ready(out)

    # Reference check against plain-JAX einsum (same semantics as the torch module).
    ref = jnp.einsum("nvc,nvw->nwc", x.astype(jnp.float32), A)
    assert out.shape == (N, W, C)
    assert out.dtype == jnp.float32
    assert jnp.allclose(out, ref, atol=1e-5, rtol=1e-5), "mismatch vs einsum reference"

    print("KERNEL_OK")
</pallas_src>

<mosaic_0001>
module attributes {stable_mosaic.version = 11 : i64} {
  func.func @_gconv_rnn_kernel(%arg0: i32, %arg1: memref<2x16x16xf32, #tpu.memory_space<vmem>>, %arg2: memref<2x16x32xf32, #tpu.memory_space<vmem>>, %arg3: memref<2x16x32xf32, #tpu.memory_space<vmem>>) attributes {dimension_semantics = [#tpu.dimension_semantics<parallel>], iteration_bounds = array<i64: 1>, scalar_prefetch = 0 : i64, scratch_operands = 0 : i64, tpu.core_type = #tpu.core_type<tc>, window_params = [{transform_indices = @transform_0, window_bounds = array<i64: 2, 16, 16>}, {transform_indices = @transform_1, window_bounds = array<i64: 2, 16, 32>}, {transform_indices = @transform_2, window_bounds = array<i64: 2, 16, 32>}]} {
    %c0 = arith.constant 0 : index
    %c0_0 = arith.constant 0 : index
    %c0_1 = arith.constant 0 : index
    %0 = vector.load %arg1[%c0, %c0_0, %c0_1] : memref<2x16x16xf32, #tpu.memory_space<vmem>>, vector<2x16x16xf32>
    %c0_2 = arith.constant 0 : index
    %c0_3 = arith.constant 0 : index
    %c0_4 = arith.constant 0 : index
    %1 = vector.load %arg2[%c0_2, %c0_3, %c0_4] : memref<2x16x32xf32, #tpu.memory_space<vmem>>, vector<2x16x32xf32>
    %cst = arith.constant dense<0.000000e+00> : vector<2x16x32xf32>
    %2 = tpu.matmul %0, %1, %cst {dimension_numbers = #tpu.dot_dimension_numbers<[2], [1], [1], [2], [0, 0, 0, 1, 1, 2], [0], [0]>} : vector<2x16x16xf32>, vector<2x16x32xf32>, vector<2x16x32xf32> -> vector<2x16x32xf32>
    %c0_5 = arith.constant 0 : index
    %c0_6 = arith.constant 0 : index
    %c0_7 = arith.constant 0 : index
    %3 = vector.load %arg3[%c0_5, %c0_6, %c0_7] : memref<2x16x32xf32, #tpu.memory_space<vmem>>, vector<2x16x32xf32>
    tpu.vector_store %arg3[%c0_5, %c0_6, %c0_7], %2 {strides = array<i32>} : memref<2x16x32xf32, #tpu.memory_space<vmem>>, vector<2x16x32xf32>,
    return
  }
  func.func @transform_0(%arg0: i32) -> (i32, i32, i32) {
    %c0_i32 = arith.constant 0 : i32
    %c0_i32_0 = arith.constant 0 : i32
    %c0_i32_1 = arith.constant 0 : i32
    return %arg0, %c0_i32, %c0_i32_0 : i32, i32, i32
  }
  func.func @transform_1(%arg0: i32) -> (i32, i32, i32) {
    %c0_i32 = arith.constant 0 : i32
    %c0_i32_0 = arith.constant 0 : i32
    %c0_i32_1 = arith.constant 0 : i32
    return %arg0, %c0_i32, %c0_i32_0 : i32, i32, i32
  }
  func.func @transform_2(%arg0: i32) -> (i32, i32, i32) {
    %c0_i32 = arith.constant 0 : i32
    %c0_i32_0 = arith.constant 0 : i32
    %c0_i32_1 = arith.constant 0 : i32
    return %arg0, %c0_i32, %c0_i32_0 : i32, i32, i32
  }
}

</mosaic_0001>

<llo_original>
// kernel: tpu_custom_call.1
$region0: #{tpu_custom_call.1}
  #allocation0 [shape = 'u32[]', space=smem, size = 0x4, offset = 0x4, fixed_abs, tag = 'smem constant byte address 0x4 - core index']
  #allocation1 [shape = 'u32[72,128]{1,0:T(1,128)}', space=vmem, size = 0x9000, scoped, tag = 'internal scratch']
  %s0 = inlined_call_operand.hbm [shape: f32[2,16,16], index: 0, kind: input, shape index: {}]
  %s1 = inlined_call_operand.hbm [shape: f32[2,16,32], index: 1, kind: input, shape index: {}]
  %s2 = inlined_call_operand.hbm [shape: f32[2,16,32], index: 2, kind: output, shape index: {}]
  %s3 = sld [smem:[#allocation0]]
  $region26: #{tpu_custom_call.1} parent=0
    _
  %s5 = ssub.s32 1, %s3
  %s6 = scalar_select 0, %s5, %s3
  $region1: #{tpu_custom_call.1} parent=0
    #allocation2 [shape = 'u8[16384]{0}', space=vmem, size = 0x4000, scoped, tag = 'input window, operand 0, single buffered']
    #allocation3 [shape = 's32[1]{0}', space=sflag, size = 0x4, scoped, tag = 'scoped memory for tpu_custom_call.1']
    #allocation4 [shape = 's32[1]{0}', space=sflag, size = 0x4, scoped, tag = 'scoped memory for tpu_custom_call.1']
    #allocation5 [shape = 'u8[16384]{0}', space=vmem, size = 0x4000, scoped, tag = 'input window, operand 1, single buffered']
    #allocation6 [shape = 's32[1]{0}', space=sflag, size = 0x4, scoped, tag = 'scoped memory for tpu_custom_call.1']
    #allocation7 [shape = 'u8[16384]{0}', space=vmem, size = 0x4000, scoped, tag = 'output window, operand 0, single buffered']
    %7 = vsyncpa [#allocation3], 0
    %8 = vsyncpa [#allocation6], 0
    %9 = vsyncpa [#allocation4], 0
    // Predicated region
    $region2: #{tpu_custom_call.1} parent=1 // pred_check
      _
    $region3: #{tpu_custom_call.1} parent=1 // pred_check_branch
      %11 = sbr.rel (0) target = $region5
    $region4: #{tpu_custom_call.1} parent=1 // pred_region
      %13 = vsyncadd [#allocation3], 0
      %s14 = sshll.u32 %s0, 4
      %s15 = int_to_ptr.hbm [resolvable:$true] %s14
      %s16 = sshll.u32 [#allocation2], 4
      %s17 = int_to_ptr.vmem [resolvable:$true] %s16
      %22 = dma.hbm_to_vmem [thread:$0]  %s15, 512, %s17, [#allocation3], 128, 128, 8
    $region5: #{tpu_custom_call.1} parent=1 // pred_fallthru
      _
    // Predicated region
    $region6: #{tpu_custom_call.1} parent=1 // pred_check
      _
    $region7: #{tpu_custom_call.1} parent=1 // pred_check_branch
      %24 = sbr.rel (0) target = $region9
    $region8: #{tpu_custom_call.1} parent=1 // pred_region
      %26 = vsyncadd [#allocation6], 0
      %s27 = sshll.u32 %s1, 4
      %s28 = int_to_ptr.hbm [resolvable:$true] %s27
      %s29 = sshll.u32 [#allocation5], 4
      %s30 = int_to_ptr.vmem [resolvable:$true] %s29
      %35 = dma.hbm_to_vmem [thread:$0]  %s28, 512, %s30, [#allocation6], 128, 128, 8
    $region9: #{tpu_custom_call.1} parent=1 // pred_fallthru
      _
    // Predicated region
    $region10: #{tpu_custom_call.1} parent=1 // pred_check
      _
    $region11: #{tpu_custom_call.1} parent=1 // pred_check_branch
      %37 = sbr.rel (0) target = $region13
    $region12: #{tpu_custom_call.1} parent=1 // pred_region
      %39 = dma.done [#allocation3], 512
    $region13: #{tpu_custom_call.1} parent=1 // pred_fallthru
      _
    // Predicated region
    $region14: #{tpu_custom_call.1} parent=1 // pred_check
      _
    $region15: #{tpu_custom_call.1} parent=1 // pred_check_branch
      %41 = sbr.rel (0) target = $region17
    $region16: #{tpu_custom_call.1} parent=1 // pred_region
      %43 = dma.done [#allocation6], 512
    $region17: #{tpu_custom_call.1} parent=1 // pred_fallthru
      _
    %v44 = vld [vmem:[#allocation2] sm:$0xff]
    %v45 = vld [vmem:[#allocation2 + $0x8] sm:$0xff]
    %v46 = vld [vmem:[#allocation2 + $0x10] sm:$0xff]
    %v47 = vld [vmem:[#allocation2 + $0x18] sm:$0xff]
    %v48 = vld [vmem:[#allocation5] sm:$0xff]
    %v49 = vld [vmem:[#allocation5 + $0x8] sm:$0xff]
    %v50 = vld [vmem:[#allocation5 + $0x10] sm:$0xff]
    %v51 = vld [vmem:[#allocation5 + $0x18] sm:$0xff]
    %vm52 = vcmask 130048
    %v54 = vsel %vm52, %v44, 0
    %v57 = vsel %vm52, %v45, 0
    %59 = vmatpush.msra.mxu0 0.0
    %60 = vmatpush.msra.mxu0 0.0
    %61 = vmatpush.msra.mxu0 0.0
    %62 = vmatpush.msra.mxu0 0.0
    %63 = vmatpush.msra.mxu0 0.0
    %64 = vmatpush.msra.mxu0 0.0
    %65 = vmatpush.msra.mxu0 0.0
    %66 = vmatpush.msra.mxu0 0.0
    %67 = vmatpush.msra.mxu0 0.0
    %68 = vmatpush.msra.mxu0 0.0
    %69 = vmatpush.msra.mxu0 0.0
    %70 = vmatpush.msra.mxu0 0.0
    %71 = vmatpush.msra.mxu0 0.0
    %72 = vmatpush.msra.mxu0 0.0
    %73 = vmatpush.msra.mxu0 %v49
    %74 = vmatpush.msra.mxu0 %v48
    %75 = vmatmul.f32.gmra.mxu0 %v54
    %v76 = vpop.f32.mrf.mxu0
    %v77 = vadd.f32 0.0, %v76
    %78 = vmatmul.f32.gmra.mxu0 %v57
    %v79 = vpop.f32.mrf.mxu0
    %v80 = vadd.f32 0.0, %v79
    %81 = vdwg.mxu0
    %v83 = vsel %vm52, %v46, 0
    %v86 = vsel %vm52, %v47, 0
    %88 = vmatpush.msra.mxu0 0.0
    %89 = vmatpush.msra.mxu0 0.0
    %90 = vmatpush.msra.mxu0 0.0
    %91 = vmatpush.msra.mxu0 0.0
    %92 = vmatpush.msra.mxu0 0.0
    %93 = vmatpush.msra.mxu0 0.0
    %94 = vmatpush.msra.mxu0 0.0
    %95 = vmatpush.msra.mxu0 0.0
    %96 = vmatpush.msra.mxu0 0.0
    %97 = vmatpush.msra.mxu0 0.0
    %98 = vmatpush.msra.mxu0 0.0
    %99 = vmatpush.msra.mxu0 0.0
    %100 = vmatpush.msra.mxu0 0.0
    %101 = vmatpush.msra.mxu0 0.0
    %102 = vmatpush.msra.mxu0 %v51
    %103 = vmatpush.msra.mxu0 %v50
    %104 = vmatmul.f32.gmra.mxu0 %v83
    %v105 = vpop.f32.mrf.mxu0
    %v106 = vadd.f32 0.0, %v105
    %107 = vmatmul.f32.gmra.mxu0 %v86
    %v108 = vpop.f32.mrf.mxu0
    %v109 = vadd.f32 0.0, %v108
    %110 = vdwg.mxu0
    %vm111 = vcmask 261120
    %112 = vst.msk [vmem:[#allocation7] sm:$0xff] %vm111, %v77
    %113 = vst.msk [vmem:[#allocation7 + $0x8] sm:$0xff] %vm111, %v80
    %114 = vst.msk [vmem:[#allocation7 + $0x10] sm:$0xff] %vm111, %v106
    %115 = vst.msk [vmem:[#allocation7 + $0x18] sm:$0xff] %vm111, %v109
    // Predicated region
    $region18: #{tpu_custom_call.1} parent=1 // pred_check
      _
    $region19: #{tpu_custom_call.1} parent=1 // pred_check_branch
      %117 = sbr.rel (0) target = $region21
    $region20: #{tpu_custom_call.1} parent=1 // pred_region
      %119 = vsyncadd [#allocation4], 0
      %s120 = sshll.u32 [#allocation7], 4
      %s121 = int_to_ptr.vmem [resolvable:$true] %s120
      %s122 = sshll.u32 %s2, 4
      %s123 = int_to_ptr.hbm [resolvable:$true] %s122
      %128 = dma.vmem_to_hbm [thread:$0]  %s121, 512, %s123, [#allocation4], 128, 128, 8
    $region21: #{tpu_custom_call.1} parent=1 // pred_fallthru
      _
    // Predicated region
    $region22: #{tpu_custom_call.1} parent=1 // pred_check
      _
    $region23: #{tpu_custom_call.1} parent=1 // pred_check_branch
      %130 = sbr.rel (0) target = $region25
    $region24: #{tpu_custom_call.1} parent=1 // pred_region
      %132 = dma.done [#allocation4], 512
    $region25: #{tpu_custom_call.1} parent=1 // pred_fallthru
      _
    %133 = vsyncpa [#allocation3], 1
    %134 = vsyncpa [#allocation6], 1
    %135 = vsyncpa [#allocation4], 1

</llo_original>
